<compile_context>
chip_gen: v7x
topology: tpu7x:2x2x1
jax: 0.10.0
libtpu: 0.0.40
codegen_flags: <defaults>
</compile_context>

<pallas_src>
import jax
import jax.numpy as jnp
from jax.experimental import pallas as pl
from jax.experimental.pallas import tpu as pltpu

_IN, _HID, _OUT = 4, 10, 2
# Samples packed per row: x (B,4) -> (B/R, 4R).  R=32 makes the input block
# exactly 128 lanes wide (one full vreg of lanes, unmasked loads) while
# keeping the replicated-weight FLOP inflation moderate.
_R = 32
# Up to 4096 rows * 32 samples = 131072 samples per grid step.
_MAX_TILE_ROWS = 4096
# Keep >= 8 grid steps (>= 4 per TensorCore on v7x) for 2-TC scaling and
# input/output double-buffering.
_MIN_GRID_STEPS = 8
# Below this batch size the pallas_call fixed cost dominates: use plain XLA.
_MIN_PALLAS_BATCH = 2048


def _round_up(n, m):
    return ((n + m - 1) // m) * m


def _mlp_kernel(x_ref, w1_ref, b1_ref, w2_ref, b2_ref, o_ref):
    # x_ref : (tile_r, 4*R)   -- 32 samples per row, 4 features each (lane-dense)
    # w1_ref: (4*R, 10*R)     block-diagonal replicated W1^T;  b1_ref: (1, 10*R)
    # w2_ref: (10*R, 2*R)     block-diagonal replicated W2^T;  b2_ref: (1, 2*R)
    # o_ref : (tile_r, 2*R)
    x = x_ref[...]
    h = jnp.dot(x, w1_ref[...], preferred_element_type=jnp.float32)
    h = jnp.maximum(h + b1_ref[...], 0.0)                        # fc1 + ReLU
    y = jnp.dot(h, w2_ref[...], preferred_element_type=jnp.float32)
    o_ref[...] = (y + b2_ref[...]).astype(o_ref.dtype)           # fc2


def _replicated_weights(w1, b1, w2, b2):
    # Block-diagonal replication (tiny, ~250 KiB total).  Cheap to rebuild
    # under jit; callers doing many forward passes can hoist this.
    eye = jnp.eye(_R, dtype=jnp.float32)
    w1_big = jnp.kron(eye, w1.T.astype(jnp.float32))              # (128, 320)
    w2_big = jnp.kron(eye, w2.T.astype(jnp.float32))              # (320, 64)
    b1_big = jnp.tile(b1.astype(jnp.float32), _R).reshape(1, _HID * _R)
    b2_big = jnp.tile(b2.astype(jnp.float32), _R).reshape(1, _OUT * _R)
    return w1_big, b1_big, w2_big, b2_big


def _pallas_forward(x, w1, b1, w2, b2):
    B = x.shape[0]
    dtype = x.dtype

    # Pad the batch to a multiple of R only if actually needed; the aligned
    # common case costs zero extra HBM passes.
    b_pad = _round_up(B, _R)
    if b_pad != B:
        x = jnp.pad(x, ((0, b_pad - B), (0, 0)))
    rows = b_pad // _R
    xw = x.reshape(rows, _IN * _R)            # no-copy view (contiguous layout)

    # Largest lane-aligned tile that still leaves >= _MIN_GRID_STEPS steps.
    # The ragged final block (if any) is masked by Pallas, so tile choice
    # never adds padded DMA traffic or output writes.
    tile_r = max(8, _round_up(-(-rows // _MIN_GRID_STEPS), 8))
    tile_r = min(tile_r, _MAX_TILE_ROWS, _round_up(rows, 8))
    grid = (pl.cdiv(rows, tile_r),)

    w1_big, b1_big, w2_big, b2_big = _replicated_weights(w1, b1, w2, b2)

    out = pl.pallas_call(
        _mlp_kernel,
        out_shape=jax.ShapeDtypeStruct((rows, _OUT * _R), dtype),
        grid=grid,
        in_specs=[
            # x: tiled along the batch-row axis, lane-dense (128-wide blocks).
            pl.BlockSpec((tile_r, _IN * _R), lambda i: (i, 0)),
            # Weights/biases: constant index_maps -> VMEM-resident across grid.
            pl.BlockSpec((_IN * _R, _HID * _R), lambda i: (0, 0)),
            pl.BlockSpec((1, _HID * _R), lambda i: (0, 0)),
            pl.BlockSpec((_HID * _R, _OUT * _R), lambda i: (0, 0)),
            pl.BlockSpec((1, _OUT * _R), lambda i: (0, 0)),
        ],
        out_specs=pl.BlockSpec((tile_r, _OUT * _R), lambda i: (i, 0)),
        compiler_params=pltpu.CompilerParams(
            dimension_semantics=("parallel",),
            vmem_limit_bytes=40 * 1024 * 1024,
        ),
    )(xw, w1_big, b1_big, w2_big, b2_big)

    out = out.reshape(b_pad, _OUT)            # no-copy view back to (B_pad, 2)
    return out if b_pad == B else out[:B]


@jax.jit
def perceptron_forward(x, w1, b1, w2, b2):
    """Forward pass matching PyTorch PerceptronModel.

    x: (B, 4); w1: (10, 4); b1: (10,); w2: (2, 10); b2: (2,)  ->  (B, 2)
    """
    if x.shape[0] < _MIN_PALLAS_BATCH:
        # Tiny batches: skip Pallas, the kernel launch overhead can't win.
        h = jnp.maximum(jnp.dot(x, w1.T) + b1, 0.0)
        return jnp.dot(h, w2.T) + b2
    return _pallas_forward(x, w1, b1, w2, b2)


def init_params(key):
    """Deterministic init mimicking nn.Linear (PyTorch (out, in) shapes)."""
    k1, k2, k3, k4 = jax.random.split(key, 4)
    bound1 = 1.0 / jnp.sqrt(4.0)
    w1 = jax.random.uniform(k1, (_HID, _IN), jnp.float32, -bound1, bound1)
    b1 = jax.random.uniform(k2, (_HID,), jnp.float32, -bound1, bound1)
    bound2 = 1.0 / jnp.sqrt(10.0)
    w2 = jax.random.uniform(k3, (_OUT, _HID), jnp.float32, -bound2, bound2)
    b2 = jax.random.uniform(k4, (_OUT,), jnp.float32, -bound2, bound2)
    return w1, b1, w2, b2


if __name__ == "__main__":
    key = jax.random.PRNGKey(0)
    kx, kp = jax.random.split(key)
    w1, b1, w2, b2 = init_params(kp)

    def reference(xb):
        h = jnp.maximum(
            jnp.dot(xb, w1.T, precision=jax.lax.Precision.HIGHEST) + b1, 0.0)
        return jnp.dot(h, w2.T, precision=jax.lax.Precision.HIGHEST) + b2

    # 4096 -> Pallas path, evenly tiled; 4000 -> Pallas path with a ragged
    # final block; 8 -> small-batch XLA fallback.
    for batch in (4096, 4000, 8):
        xb = jax.random.normal(jax.random.fold_in(kx, batch), (batch, _IN),
                               jnp.float32)
        out = jax.block_until_ready(perceptron_forward(xb, w1, b1, w2, b2))
        ref = reference(xb)
        assert out.shape == (batch, _OUT), (out.shape, batch)
        assert jnp.allclose(out, ref, atol=1e-4, rtol=1e-4), (
            batch, float(jnp.max(jnp.abs(out - ref))))

    print("KERNEL_OK")
</pallas_src>

<mosaic_0001>
module attributes {stable_mosaic.version = 11 : i64} {
  func.func @_mlp_kernel(%arg0: i32, %arg1: memref<16x128xf32, #tpu.memory_space<vmem>>, %arg2: memref<128x320xf32, #tpu.memory_space<vmem>>, %arg3: memref<1x320xf32, #tpu.memory_space<vmem>>, %arg4: memref<320x64xf32, #tpu.memory_space<vmem>>, %arg5: memref<1x64xf32, #tpu.memory_space<vmem>>, %arg6: memref<16x64xf32, #tpu.memory_space<vmem>>) attributes {dimension_semantics = [#tpu.dimension_semantics<parallel>], iteration_bounds = array<i64: 8>, scalar_prefetch = 0 : i64, scratch_operands = 0 : i64, tpu.core_type = #tpu.core_type<tc>, window_params = [{transform_indices = @transform_0, window_bounds = array<i64: 16, 128>}, {pipeline_mode = #tpu.pipeline_mode<synchronous>, transform_indices = @transform_1, window_bounds = array<i64: 128, 320>}, {pipeline_mode = #tpu.pipeline_mode<synchronous>, transform_indices = @transform_2, window_bounds = array<i64: 1, 320>}, {pipeline_mode = #tpu.pipeline_mode<synchronous>, transform_indices = @transform_3, window_bounds = array<i64: 320, 64>}, {pipeline_mode = #tpu.pipeline_mode<synchronous>, transform_indices = @transform_4, window_bounds = array<i64: 1, 64>}, {transform_indices = @transform_5, window_bounds = array<i64: 16, 64>}]} {
    %c0 = arith.constant 0 : index
    %c0_0 = arith.constant 0 : index
    %0 = vector.load %arg1[%c0, %c0_0] : memref<16x128xf32, #tpu.memory_space<vmem>>, vector<16x128xf32>
    %c0_1 = arith.constant 0 : index
    %c0_2 = arith.constant 0 : index
    %1 = vector.load %arg2[%c0_1, %c0_2] : memref<128x320xf32, #tpu.memory_space<vmem>>, vector<128x320xf32>
    %cst = arith.constant dense<0.000000e+00> : vector<16x320xf32>
    %2 = tpu.matmul %0, %1, %cst {dimension_numbers = #tpu.dot_dimension_numbers<[1], [0], [0], [1], [0, 0, 1, 1], [], []>} : vector<16x128xf32>, vector<128x320xf32>, vector<16x320xf32> -> vector<16x320xf32>
    %c0_3 = arith.constant 0 : index
    %c0_4 = arith.constant 0 : index
    %3 = vector.load %arg3[%c0_3, %c0_4] : memref<1x320xf32, #tpu.memory_space<vmem>>, vector<1x320xf32>
    %4 = vector.broadcast %3 : vector<1x320xf32> to vector<16x320xf32>
    %5 = arith.addf %2, %4 : vector<16x320xf32>
    %cst_5 = arith.constant 0.000000e+00 : f32
    %6 = vector.broadcast %cst_5 : f32 to vector<16x320xf32>
    %7 = arith.maximumf %5, %6 : vector<16x320xf32>
    %c0_6 = arith.constant 0 : index
    %c0_7 = arith.constant 0 : index
    %8 = vector.load %arg4[%c0_6, %c0_7] : memref<320x64xf32, #tpu.memory_space<vmem>>, vector<320x64xf32>
    %cst_8 = arith.constant dense<0.000000e+00> : vector<16x64xf32>
    %9 = tpu.matmul %7, %8, %cst_8 {dimension_numbers = #tpu.dot_dimension_numbers<[1], [0], [0], [1], [0, 0, 1, 1], [], []>} : vector<16x320xf32>, vector<320x64xf32>, vector<16x64xf32> -> vector<16x64xf32>
    %c0_9 = arith.constant 0 : index
    %c0_10 = arith.constant 0 : index
    %10 = vector.load %arg5[%c0_9, %c0_10] : memref<1x64xf32, #tpu.memory_space<vmem>>, vector<1x64xf32>
    %11 = vector.broadcast %10 : vector<1x64xf32> to vector<16x64xf32>
    %12 = arith.addf %9, %11 : vector<16x64xf32>
    %c0_11 = arith.constant 0 : index
    %c0_12 = arith.constant 0 : index
    %13 = vector.load %arg6[%c0_11, %c0_12] : memref<16x64xf32, #tpu.memory_space<vmem>>, vector<16x64xf32>
    tpu.vector_store %arg6[%c0_11, %c0_12], %12 {strides = array<i32>} : memref<16x64xf32, #tpu.memory_space<vmem>>, vector<16x64xf32>,
    return
  }
  func.func @transform_0(%arg0: i32) -> (i32, i32) {
    %c0_i32 = arith.constant 0 : i32
    %c0_i32_0 = arith.constant 0 : i32
    return %arg0, %c0_i32 : i32, i32
  }
  func.func @transform_1(%arg0: i32) -> (i32, i32) {
    %c0_i32 = arith.constant 0 : i32
    %c0_i32_0 = arith.constant 0 : i32
    %c0_i32_1 = arith.constant 0 : i32
    return %c0_i32, %c0_i32_0 : i32, i32
  }
  func.func @transform_2(%arg0: i32) -> (i32, i32) {
    %c0_i32 = arith.constant 0 : i32
    %c0_i32_0 = arith.constant 0 : i32
    %c0_i32_1 = arith.constant 0 : i32
    return %c0_i32, %c0_i32_0 : i32, i32
  }
  func.func @transform_3(%arg0: i32) -> (i32, i32) {
    %c0_i32 = arith.constant 0 : i32
    %c0_i32_0 = arith.constant 0 : i32
    %c0_i32_1 = arith.constant 0 : i32
    return %c0_i32, %c0_i32_0 : i32, i32
  }
  func.func @transform_4(%arg0: i32) -> (i32, i32) {
    %c0_i32 = arith.constant 0 : i32
    %c0_i32_0 = arith.constant 0 : i32
    %c0_i32_1 = arith.constant 0 : i32
    return %c0_i32, %c0_i32_0 : i32, i32
  }
  func.func @transform_5(%arg0: i32) -> (i32, i32) {
    %c0_i32 = arith.constant 0 : i32
    %c0_i32_0 = arith.constant 0 : i32
    return %arg0, %c0_i32 : i32, i32
  }
}

</mosaic_0001>

<llo_original>
// kernel: tile.13
$region0: #{tile.13}
  #allocation0 [shape = 's32[1]{0}', space=sflag, size = 0x4, scoped, tag = 'scoped memory for tile.13']
  %s0 = inlined_call_operand.vmem [shape: f32[10], index: 0, kind: input, shape index: {}]
  %s1 = inlined_call_operand.vmem [shape: f32[32,10], index: 1, kind: output, shape index: {}]
  // Predicated region
  $region2: #{tile.13} parent=0 // pred_check
    _
  $region3: #{tile.13} parent=0 // pred_check_branch
    %3 = sbr.rel (0) target = $region5
  $region4: #{tile.13} parent=0 // pred_region
    _
  $region5: #{tile.13} parent=0 // pred_fallthru
    _
  %v4 = vld [vmem:[%s0] ss:$0 sm:$0xff]
  %5 = vst [vmem:[%s1] sm:$0xff] %v4
  %s6 = scalar_lea.vmem %s1, 8
  %7 = vst [vmem:[%s6] sm:$0xff] %v4
  %s8 = scalar_lea.vmem %s1, 16
  %9 = vst [vmem:[%s8] sm:$0xff] %v4
  %s10 = scalar_lea.vmem %s1, 24
  %11 = vst [vmem:[%s10] sm:$0xff] %v4

// kernel: tile.14
$region0: #{tile.14}
  %s0 = inlined_call_operand.vmem [shape: f32[32,10], index: 0, kind: input, shape index: {}]
  %s1 = inlined_call_operand.vmem [shape: f32[1,320], index: 1, kind: output, shape index: {}]
  $region1: #{tile.14} parent=0
    #allocation0 [shape = 'u8[12288]{0}', space=vmem, size = 0x3000, scoped, tag = 'scoped mem for output reshape']
    %v2 = vld [vmem:[%s0] sm:$0x1]
    %vm3 = vcmask 80896
    %4 = vst.msk [vmem:[#allocation0] sm:$0x1] %vm3, %v2
    %s5 = scalar_lea.vmem %s0, 25
    %v6 = vld [vmem:[%s5] sm:$0x1]
    %s7 = scalar_lea.vmem %s0, 25
    %v8 = vld [vmem:[%s7] sm:$0x1]
    %vm9 = vcmask 48128
    %v10 = vsel %vm9, %v8, %v6
    %11 = vrot.lane.b32.xlu0 %v10, 122
    %v12 = vpop.permute.xlu0 %11
    %vm13 = vcmask 31744
    %s14 = scalar_lea.vmem [#allocation0], 16
    %15 = vst.msk [vmem:[%s14] sm:$0x1] %vm13, %v12
    %vm16 = vcmask 1048528
    %s17 = scalar_lea.vmem [#allocation0], 8
    %18 = vst.msk [vmem:[%s17] sm:$0x1] %vm16, %v12
    %s19 = scalar_lea.vmem %s0, 12
    %v20 = vld [vmem:[%s19] sm:$0x1]
    %s21 = scalar_lea.vmem %s0, 12
    %v22 = vld [vmem:[%s21] sm:$0x1]
    %vm23 = vcmask 64512
    %v24 = vsel %vm23, %v22, %v20
    %25 = vrot.lane.b32.xlu0 %v24, 120
    %v26 = vpop.permute.xlu0 %25
    %vm27 = vcmask 15360
    %s28 = scalar_lea.vmem [#allocation0], 8
    %29 = vst.msk [vmem:[%s28] sm:$0x1] %vm27, %v26
    %vm30 = vcmask 1048512
    %31 = vst.msk [vmem:[#allocation0] sm:$0x1] %vm30, %v26
    %s32 = scalar_lea.vmem %s0, 24
    %v33 = vld [vmem:[%s32] sm:$0x1]
    %34 = vrot.lane.b32.xlu0 %v33, 112
    %v35 = vpop.permute.xlu0 %34
    %vm36 = vcmask 999296
    %s37 = scalar_lea.vmem [#allocation0], 8
    %38 = vst.msk [vmem:[%s37] sm:$0x1] %vm36, %v35
    %s39 = scalar_lea.vmem %s0, 11
    %v40 = vld [vmem:[%s39] sm:$0x1]
    %41 = vrot.lane.b32.xlu0 %v40, 110
    %v42 = vpop.permute.xlu0 %41
    %vm43 = vcmask 982896
    %44 = vst.msk [vmem:[#allocation0] sm:$0x1] %vm43, %v42
    %s45 = scalar_lea.vmem %s0, 23
    %v46 = vld [vmem:[%s45] sm:$0x1]
    %47 = vrot.lane.b32.xlu0 %v46, 102
    %v48 = vpop.permute.xlu0 %47
    %vm49 = vcmask 917296
    %s50 = scalar_lea.vmem [#allocation0], 8
    %51 = vst.msk [vmem:[%s50] sm:$0x1] %vm49, %v48
    %s52 = scalar_lea.vmem %s0, 10
    %v53 = vld [vmem:[%s52] sm:$0x1]
    %54 = vrot.lane.b32.xlu0 %v53, 100
    %v55 = vpop.permute.xlu0 %54
    %vm56 = vcmask 900896
    %57 = vst.msk [vmem:[#allocation0] sm:$0x1] %vm56, %v55
    %s58 = scalar_lea.vmem %s0, 22
    %v59 = vld [vmem:[%s58] sm:$0x1]
    %60 = vrot.lane.b32.xlu0 %v59, 92
    %v61 = vpop.permute.xlu0 %60
    %vm62 = vcmask 835296
    %s63 = scalar_lea.vmem [#allocation0], 8
    %64 = vst.msk [vmem:[%s63] sm:$0x1] %vm62, %v61
    %s65 = scalar_lea.vmem %s0, 9
    %v66 = vld [vmem:[%s65] sm:$0x1]
    %67 = vrot.lane.b32.xlu0 %v66, 90
    %v68 = vpop.permute.xlu0 %67
    %vm69 = vcmask 818896
    %70 = vst.msk [vmem:[#allocation0] sm:$0x1] %vm69, %v68
    %s71 = scalar_lea.vmem %s0, 21
    %v72 = vld [vmem:[%s71] sm:$0x1]
    %73 = vrot.lane.b32.xlu0 %v72, 82
    %v74 = vpop.permute.xlu0 %73
    %vm75 = vcmask 753296
    %s76 = scalar_lea.vmem [#allocation0], 8
    %77 = vst.msk [vmem:[%s76] sm:$0x1] %vm75, %v74
    %s78 = scalar_lea.vmem %s0, 8
    %v79 = vld [vmem:[%s78] sm:$0x1]
    %80 = vrot.lane.b32.xlu0 %v79, 80
    %v81 = vpop.permute.xlu0 %80
    %vm82 = vcmask 736896
    %83 = vst.msk [vmem:[#allocation0] sm:$0x1] %vm82, %v81
    %s84 = scalar_lea.vmem %s0, 20
    %v85 = vld [vmem:[%s84] sm:$0x1]
    %86 = vrot.lane.b32.xlu0 %v85, 72
    %v87 = vpop.permute.xlu0 %86
    %vm88 = vcmask 671296
    %s89 = scalar_lea.vmem [#allocation0], 8
    %90 = vst.msk [vmem:[%s89] sm:$0x1] %vm88, %v87
    %s91 = scalar_lea.vmem %s0, 7
    %v92 = vld [vmem:[%s91] sm:$0x1]
    %93 = vrot.lane.b32.xlu0 %v92, 70
    %v94 = vpop.permute.xlu0 %93
    %vm95 = vcmask 654896
    %96 = vst.msk [vmem:[#allocation0] sm:$0x1] %vm95, %v94
    %s97 = scalar_lea.vmem %s0, 19
    %v98 = vld [vmem:[%s97] sm:$0x1]
    %99 = vrot.lane.b32.xlu0 %v98, 62
    %v100 = vpop.permute.xlu0 %99
    %vm101 = vcmask 589296
    %s102 = scalar_lea.vmem [#allocation0], 8
    %103 = vst.msk [vmem:[%s102] sm:$0x1] %vm101, %v100
    %s104 = scalar_lea.vmem %s0, 6
    %v105 = vld [vmem:[%s104] sm:$0x1]
    %106 = vrot.lane.b32.xlu0 %v105, 60
    %v107 = vpop.permute.xlu0 %106
    %vm108 = vcmask 572896
    %109 = vst.msk [vmem:[#allocation0] sm:$0x1] %vm108, %v107
    %s110 = scalar_lea.vmem %s0, 31
    %v111 = vld [vmem:[%s110] sm:$0x1]
    %112 = vrot.lane.b32.xlu0 %v111, 54
    %v113 = vpop.permute.xlu0 %112
    %vm114 = vcmask 523696
    %s115 = scalar_lea.vmem [#allocation0], 16
    %116 = vst.msk [vmem:[%s115] sm:$0x1] %vm114, %v113
    %s117 = scalar_lea.vmem %s0, 18
    %v118 = vld [vmem:[%s117] sm:$0x1]
    %119 = vrot.lane.b32.xlu0 %v118, 52
    %v120 = vpop.permute.xlu0 %119
    %vm121 = vcmask 507296
    %s122 = scalar_lea.vmem [#allocation0], 8
    %123 = vst.msk [vmem:[%s122] sm:$0x1] %vm121, %v120
    %s124 = scalar_lea.vmem %s0, 5
    %v125 = vld [vmem:[%s124] sm:$0x1]
    %126 = vrot.lane.b32.xlu0 %v125, 50
    %v127 = vpop.permute.xlu0 %126
    %vm128 = vcmask 490896
    %129 = vst.msk [vmem:[#allocation0] sm:$0x1] %vm128, %v127
    %s130 = scalar_lea.vmem %s0, 30
    %v131 = vld [vmem:[%s130] sm:$0x1]
    %132 = vrot.lane.b32.xlu0 %v131, 44
    %v133 = vpop.permute.xlu0 %132
    %vm134 = vcmask 441696
    %s135 = scalar_lea.vmem [#allocation0], 16
    %136 = vst.msk [vmem:[%s135] sm:$0x1] %vm134, %v133
    %s137 = scalar_lea.vmem %s0, 17
    %v138 = vld [vmem:[%s137] sm:$0x1]
    %139 = vrot.lane.b32.xlu0 %v138, 42
    %v140 = vpop.permute.xlu0 %139
    %vm141 = vcmask 425296
    %s142 = scalar_lea.vmem [#allocation0], 8
    %143 = vst.msk [vmem:[%s142] sm:$0x1] %vm141, %v140
    %s144 = scalar_lea.vmem %s0, 4
    %v145 = vld [vmem:[%s144] sm:$0x1]
    %146 = vrot.lane.b32.xlu0 %v145, 40
    %v147 = vpop.permute.xlu0 %146
    %vm148 = vcmask 408896
    %149 = vst.msk [vmem:[#allocation0] sm:$0x1] %vm148, %v147
    %s150 = scalar_lea.vmem %s0, 29
    %v151 = vld [vmem:[%s150] sm:$0x1]
    %152 = vrot.lane.b32.xlu0 %v151, 34
    %v153 = vpop.permute.xlu0 %152
    %vm154 = vcmask 359696
    %s155 = scalar_lea.vmem [#allocation0], 16
    %156 = vst.msk [vmem:[%s155] sm:$0x1] %vm154, %v153
    %s157 = scalar_lea.vmem %s0, 16
    %v158 = vld [vmem:[%s157] sm:$0x1]
    %159 = vrot.lane.b32.xlu0 %v158, 32
    %v160 = vpop.permute.xlu0 %159
    %vm161 = vcmask 343296
    %s162 = scalar_lea.vmem [#allocation0], 8
    %163 = vst.msk [vmem:[%s162] sm:$0x1] %vm161, %v160
    %s164 = scalar_lea.vmem %s0, 3
    %v165 = vld [vmem:[%s164] sm:$0x1]
    %166 = vrot.lane.b32.xlu0 %v165, 30
    %v167 = vpop.permute.xlu0 %166
    %vm168 = vcmask 326896
    %169 = vst.msk [vmem:[#allocation0] sm:$0x1] %vm168, %v167
    %s170 = scalar_lea.vmem %s0, 28
    %v171 = vld [vmem:[%s170] sm:$0x1]
    %172 = vrot.lane.b32.xlu0 %v171, 24
    %v173 = vpop.permute.xlu0 %172
    %vm174 = vcmask 277696
    %s175 = scalar_lea.vmem [#allocation0], 16
    %176 = vst.msk [vmem:[%s175] sm:$0x1] %vm174, %v173
    %s177 = scalar_lea.vmem %s0, 15
    %v178 = vld [vmem:[%s177] sm:$0x1]
    %179 = vrot.lane.b32.xlu0 %v178, 22
    %v180 = vpop.permute.xlu0 %179
    %vm181 = vcmask 261296
    %s182 = scalar_lea.vmem [#allocation0], 8
    %183 = vst.msk [vmem:[%s182] sm:$0x1] %vm181, %v180
    %s184 = scalar_lea.vmem %s0, 2
    %v185 = vld [vmem:[%s184] sm:$0x1]
    %186 = vrot.lane.b32.xlu0 %v185, 20
    %v187 = vpop.permute.xlu0 %186
    %vm188 = vcmask 244896
    %189 = vst.msk [vmem:[#allocation0] sm:$0x1] %vm188, %v187
    %s190 = scalar_lea.vmem %s0, 27
    %v191 = vld [vmem:[%s190] sm:$0x1]
    %192 = vrot.lane.b32.xlu0 %v191, 14
    %v193 = vpop.permute.xlu0 %192
    %vm194 = vcmask 195696
    %s195 = scalar_lea.vmem [#allocation0], 16
    %196 = vst.msk [vmem:[%s195] sm:$0x1] %vm194, %v193
    %s197 = scalar_lea.vmem %s0, 14
    %v198 = vld [vmem:[%s197] sm:$0x1]
    %199 = vrot.lane.b32.xlu0 %v198, 12
    %v200 = vpop.permute.xlu0 %199
    %vm201 = vcmask 179296
    %s202 = scalar_lea.vmem [#allocation0], 8
    %203 = vst.msk [vmem:[%s202] sm:$0x1] %vm201, %v200
    %s204 = scalar_lea.vmem %s0, 1
    %v205 = vld [vmem:[%s204] sm:$0x1]
    %206 = vrot.lane.b32.xlu0 %v205, 10
    %v207 = vpop.permute.xlu0 %206
    %vm208 = vcmask 162896
    %209 = vst.msk [vmem:[#allocation0] sm:$0x1] %vm208, %v207
    %s210 = scalar_lea.vmem %s0, 26
    %v211 = vld [vmem:[%s210] sm:$0x1]
    %212 = vrot.lane.b32.xlu0 %v211, 4
    %v213 = vpop.permute.xlu0 %212
    %vm214 = vcmask 113696
    %s215 = scalar_lea.vmem [#allocation0], 16
    %216 = vst.msk [vmem:[%s215] sm:$0x1] %vm214, %v213
    %s217 = scalar_lea.vmem %s0, 13
    %v218 = vld [vmem:[%s217] sm:$0x1]
    %219 = vrot.lane.b32.xlu0 %v218, 2
    %v220 = vpop.permute.xlu0 %219
    %vm221 = vcmask 97296
    %s222 = scalar_lea.vmem [#allocation0], 8
    %223 = vst.msk [vmem:[%s222] sm:$0x1] %vm221, %v220
    %s225 = sshllo.u32 0, 1
    %v227 = vld [vmem:[#allocation0] sm:%s225]
    %s228 = sshllo.u32 0, 1
    %229 = vst [vmem:[%s1] sm:%s228] %v227
    %s230 = scalar_lea.vmem [#allocation0], 8
    %v231 = vld [vmem:[%s230] sm:%s225]
    %s232 = sshllo.u32 0, 1
    %s233 = scalar_lea.vmem %s1, 1
    %234 = vst [vmem:[%s233] sm:%s232] %v231
    %s235 = scalar_lea.vmem [#allocation0], 16
    %v236 = vld [vmem:[%s235] sm:%s225]
    %s237 = sshllo.u32 0, 1
    %s238 = smul.addr 1, 2
    %s239 = scalar_lea.vmem %s1, %s238
    %240 = vst [vmem:[%s239] sm:%s237] %v236

// kernel: tile.18
$region0: #{tile.18}
  #allocation0 [shape = 's32[1]{0}', space=sflag, size = 0x4, scoped, tag = 'scoped memory for tile.18']
  %s0 = inlined_call_operand.vmem [shape: f32[2], index: 0, kind: input, shape index: {}]
  %s1 = inlined_call_operand.vmem [shape: f32[32,2], index: 1, kind: output, shape index: {}]
  // Predicated region
  $region2: #{tile.18} parent=0 // pred_check
    _
  $region3: #{tile.18} parent=0 // pred_check_branch
    %3 = sbr.rel (0) target = $region5
  $region4: #{tile.18} parent=0 // pred_region
    _
  $region5: #{tile.18} parent=0 // pred_fallthru
    _
  %v4 = vld [vmem:[%s0] ss:$0 sm:$0xff]
  %5 = vst [vmem:[%s1] sm:$0xff] %v4
  %s6 = scalar_lea.vmem %s1, 8
  %7 = vst [vmem:[%s6] sm:$0xff] %v4
  %s8 = scalar_lea.vmem %s1, 16
  %9 = vst [vmem:[%s8] sm:$0xff] %v4
  %s10 = scalar_lea.vmem %s1, 24
  %11 = vst [vmem:[%s10] sm:$0xff] %v4

// kernel: tile.19
$region0: #{tile.19}
  %s0 = inlined_call_operand.vmem [shape: f32[32,2], index: 0, kind: input, shape index: {}]
  %s1 = inlined_call_operand.vmem [shape: f32[1,64], index: 1, kind: output, shape index: {}]
  $region1: #{tile.19} parent=0
    #allocation0 [shape = 'u8[4096]{0}', space=vmem, size = 0x1000, scoped, tag = 'scoped mem for output reshape']
    %v2 = vld [vmem:[%s0] sm:$0x1]
    %vm3 = vcmask 15360
    %4 = vst.msk [vmem:[#allocation0] sm:$0x1] %vm3, %v2
    %s5 = scalar_lea.vmem %s0, 31
    %v6 = vld [vmem:[%s5] sm:$0x1]
    %7 = vrot.lane.b32.xlu0 %v6, 62
    %v8 = vpop.permute.xlu0 %7
    %vm9 = vcmask 523760
    %10 = vst.msk [vmem:[#allocation0] sm:$0x1] %vm9, %v8
    %s11 = scalar_lea.vmem %s0, 30
    %v12 = vld [vmem:[%s11] sm:$0x1]
    %13 = vrot.lane.b32.xlu0 %v12, 60
    %v14 = vpop.permute.xlu0 %13
    %vm15 = vcmask 507360
    %16 = vst.msk [vmem:[#allocation0] sm:$0x1] %vm15, %v14
    %s17 = scalar_lea.vmem %s0, 29
    %v18 = vld [vmem:[%s17] sm:$0x1]
    %19 = vrot.lane.b32.xlu0 %v18, 58
    %v20 = vpop.permute.xlu0 %19
    %vm21 = vcmask 490960
    %22 = vst.msk [vmem:[#allocation0] sm:$0x1] %vm21, %v20
    %s23 = scalar_lea.vmem %s0, 28
    %v24 = vld [vmem:[%s23] sm:$0x1]
    %25 = vrot.lane.b32.xlu0 %v24, 56
    %v26 = vpop.permute.xlu0 %25
    %vm27 = vcmask 474560
    %28 = vst.msk [vmem:[#allocation0] sm:$0x1] %vm27, %v26
    %s29 = scalar_lea.vmem %s0, 27
    %v30 = vld [vmem:[%s29] sm:$0x1]
    %31 = vrot.lane.b32.xlu0 %v30, 54
    %v32 = vpop.permute.xlu0 %31
    %vm33 = vcmask 458160
    %34 = vst.msk [vmem:[#allocation0] sm:$0x1] %vm33, %v32
    %s35 = scalar_lea.vmem %s0, 26
    %v36 = vld [vmem:[%s35] sm:$0x1]
    %37 = vrot.lane.b32.xlu0 %v36, 52
    %v38 = vpop.permute.xlu0 %37
    %vm39 = vcmask 441760
    %40 = vst.msk [vmem:[#allocation0] sm:$0x1] %vm39, %v38
    %s41 = scalar_lea.vmem %s0, 25
    %v42 = vld [vmem:[%s41] sm:$0x1]
    %43 = vrot.lane.b32.xlu0 %v42, 50
    %v44 = vpop.permute.xlu0 %43
    %vm45 = vcmask 425360
    %46 = vst.msk [vmem:[#allocation0] sm:$0x1] %vm45, %v44
    %s47 = scalar_lea.vmem %s0, 24
    %v48 = vld [vmem:[%s47] sm:$0x1]
    %49 = vrot.lane.b32.xlu0 %v48, 48
    %v50 = vpop.permute.xlu0 %49
    %vm51 = vcmask 408960
    %52 = vst.msk [vmem:[#allocation0] sm:$0x1] %vm51, %v50
    %s53 = scalar_lea.vmem %s0, 23
    %v54 = vld [vmem:[%s53] sm:$0x1]
    %55 = vrot.lane.b32.xlu0 %v54, 46
    %v56 = vpop.permute.xlu0 %55
    %vm57 = vcmask 392560
    %58 = vst.msk [vmem:[#allocation0] sm:$0x1] %vm57, %v56
    %s59 = scalar_lea.vmem %s0, 22
    %v60 = vld [vmem:[%s59] sm:$0x1]
    %61 = vrot.lane.b32.xlu0 %v60, 44
    %v62 = vpop.permute.xlu0 %61
    %vm63 = vcmask 376160
    %64 = vst.msk [vmem:[#allocation0] sm:$0x1] %vm63, %v62
    %s65 = scalar_lea.vmem %s0, 21
    %v66 = vld [vmem:[%s65] sm:$0x1]
    %67 = vrot.lane.b32.xlu0 %v66, 42
    %v68 = vpop.permute.xlu0 %67
    %vm69 = vcmask 359760
    %70 = vst.msk [vmem:[#allocation0] sm:$0x1] %vm69, %v68
    %s71 = scalar_lea.vmem %s0, 20
    %v72 = vld [vmem:[%s71] sm:$0x1]
    %73 = vrot.lane.b32.xlu0 %v72, 40
    %v74 = vpop.permute.xlu0 %73
    %vm75 = vcmask 343360
    %76 = vst.msk [vmem:[#allocation0] sm:$0x1] %vm75, %v74
    %s77 = scalar_lea.vmem %s0, 19
    %v78 = vld [vmem:[%s77] sm:$0x1]
    %79 = vrot.lane.b32.xlu0 %v78, 38
    %v80 = vpop.permute.xlu0 %79
    %vm81 = vcmask 326960
    %82 = vst.msk [vmem:[#allocation0] sm:$0x1] %vm81, %v80
    %s83 = scalar_lea.vmem %s0, 18
    %v84 = vld [vmem:[%s83] sm:$0x1]
    %85 = vrot.lane.b32.xlu0 %v84, 36
    %v86 = vpop.permute.xlu0 %85
    %vm87 = vcmask 310560
    %88 = vst.msk [vmem:[#allocation0] sm:$0x1] %vm87, %v86
    %s89 = scalar_lea.vmem %s0, 17
    %v90 = vld [vmem:[%s89] sm:$0x1]
    %91 = vrot.lane.b32.xlu0 %v90, 34
    %v92 = vpop.permute.xlu0 %91
    %vm93 = vcmask 294160
    %94 = vst.msk [vmem:[#allocation0] sm:$0x1] %vm93, %v92
    %s95 = scalar_lea.vmem %s0, 16
    %v96 = vld [vmem:[%s95] sm:$0x1]
    %97 = vrot.lane.b32.xlu0 %v96, 32
    %v98 = vpop.permute.xlu0 %97
    %vm99 = vcmask 277760
    %100 = vst.msk [vmem:[#allocation0] sm:$0x1] %vm99, %v98
    %s101 = scalar_lea.vmem %s0, 15
    %v102 = vld [vmem:[%s101] sm:$0x1]
    %103 = vrot.lane.b32.xlu0 %v102, 30
    %v104 = vpop.permute.xlu0 %103
    %vm105 = vcmask 261360
    %106 = vst.msk [vmem:[#allocation0] sm:$0x1] %vm105, %v104
    %s107 = scalar_lea.vmem %s0, 14
    %v108 = vld [vmem:[%s107] sm:$0x1]
    %109 = vrot.lane.b32.xlu0 %v108, 28
    %v110 = vpop.permute.xlu0 %109
    %vm111 = vcmask 244960
    %112 = vst.msk [vmem:[#allocation0] sm:$0x1] %vm111, %v110
    %s113 = scalar_lea.vmem %s0, 13
    %v114 = vld [vmem:[%s113] sm:$0x1]
    %115 = vrot.lane.b32.xlu0 %v114, 26
    %v116 = vpop.permute.xlu0 %115
    %vm117 = vcmask 228560
    %118 = vst.msk [vmem:[#allocation0] sm:$0x1] %vm117, %v116
    %s119 = scalar_lea.vmem %s0, 12
    %v120 = vld [vmem:[%s119] sm:$0x1]
    %121 = vrot.lane.b32.xlu0 %v120, 24
    %v122 = vpop.permute.xlu0 %121
    %vm123 = vcmask 212160
    %124 = vst.msk [vmem:[#allocation0] sm:$0x1] %vm123, %v122
    %s125 = scalar_lea.vmem %s0, 11
    %v126 = vld [vmem:[%s125] sm:$0x1]
    %127 = vrot.lane.b32.xlu0 %v126, 22
    %v128 = vpop.permute.xlu0 %127
    %vm129 = vcmask 195760
    %130 = vst.msk [vmem:[#allocation0] sm:$0x1] %vm129, %v128
    %s131 = scalar_lea.vmem %s0, 10
    %v132 = vld [vmem:[%s131] sm:$0x1]
    %133 = vrot.lane.b32.xlu0 %v132, 20
    %v134 = vpop.permute.xlu0 %133
    %vm135 = vcmask 179360
    %136 = vst.msk [vmem:[#allocation0] sm:$0x1] %vm135, %v134
    %s137 = scalar_lea.vmem %s0, 9
    %v138 = vld [vmem:[%s137] sm:$0x1]
    %139 = vrot.lane.b32.xlu0 %v138, 18
    %v140 = vpop.permute.xlu0 %139
    %vm141 = vcmask 162960
    %142 = vst.msk [vmem:[#allocation0] sm:$0x1] %vm141, %v140
    %s143 = scalar_lea.vmem %s0, 8
    %v144 = vld [vmem:[%s143] sm:$0x1]
    %145 = vrot.lane.b32.xlu0 %v144, 16
    %v146 = vpop.permute.xlu0 %145
    %vm147 = vcmask 146560
    %148 = vst.msk [vmem:[#allocation0] sm:$0x1] %vm147, %v146
    %s149 = scalar_lea.vmem %s0, 7
    %v150 = vld [vmem:[%s149] sm:$0x1]
    %151 = vrot.lane.b32.xlu0 %v150, 14
    %v152 = vpop.permute.xlu0 %151
    %vm153 = vcmask 130160
    %154 = vst.msk [vmem:[#allocation0] sm:$0x1] %vm153, %v152
    %s155 = scalar_lea.vmem %s0, 6
    %v156 = vld [vmem:[%s155] sm:$0x1]
    %157 = vrot.lane.b32.xlu0 %v156, 12
    %v158 = vpop.permute.xlu0 %157
    %vm159 = vcmask 113760
    %160 = vst.msk [vmem:[#allocation0] sm:$0x1] %vm159, %v158
    %s161 = scalar_lea.vmem %s0, 5
    %v162 = vld [vmem:[%s161] sm:$0x1]
    %163 = vrot.lane.b32.xlu0 %v162, 10
    %v164 = vpop.permute.xlu0 %163
    %vm165 = vcmask 97360
    %166 = vst.msk [vmem:[#allocation0] sm:$0x1] %vm165, %v164
    %s167 = scalar_lea.vmem %s0, 4
    %v168 = vld [vmem:[%s167] sm:$0x1]
    %169 = vrot.lane.b32.xlu0 %v168, 8
    %v170 = vpop.permute.xlu0 %169
    %vm171 = vcmask 80960
    %172 = vst.msk [vmem:[#allocation0] sm:$0x1] %vm171, %v170
    %s173 = scalar_lea.vmem %s0, 3
    %v174 = vld [vmem:[%s173] sm:$0x1]
    %175 = vrot.lane.b32.xlu0 %v174, 6
    %v176 = vpop.permute.xlu0 %175
    %vm177 = vcmask 64560
    %178 = vst.msk [vmem:[#allocation0] sm:$0x1] %vm177, %v176
    %s179 = scalar_lea.vmem %s0, 2
    %v180 = vld [vmem:[%s179] sm:$0x1]
    %181 = vrot.lane.b32.xlu0 %v180, 4
    %v182 = vpop.permute.xlu0 %181
    %vm183 = vcmask 48160
    %184 = vst.msk [vmem:[#allocation0] sm:$0x1] %vm183, %v182
    %s185 = scalar_lea.vmem %s0, 1
    %v186 = vld [vmem:[%s185] sm:$0x1]
    %187 = vrot.lane.b32.xlu0 %v186, 2
    %v188 = vpop.permute.xlu0 %187
    %vm189 = vcmask 31760
    %190 = vst.msk [vmem:[#allocation0] sm:$0x1] %vm189, %v188
    %s192 = sshllo.u32 0, 1
    %v194 = vld [vmem:[#allocation0] sm:%s192]
    %s195 = sshllo.u32 0, 1
    %196 = vst [vmem:[%s1] sm:%s195] %v194

// kernel: perceptron_forward.1
$region0: #{perceptron_forward.1}
  #allocation0 [shape = 'u32[]', space=smem, size = 0x4, offset = 0x4, fixed_abs, tag = 'smem constant byte address 0x4 - core index']
  #allocation1 [shape = 'u32[144,128]{1,0:T(1,128)}', space=vmem, size = 0x12000, scoped, tag = 'internal scratch']
  %s0 = inlined_call_operand.vmem [shape: f32[128,128], index: 0, kind: input, shape index: {}]
  %s1 = inlined_call_operand.vmem [shape: f32[128,320], index: 1, kind: input, shape index: {}]
  %s2 = inlined_call_operand.vmem [shape: f32[1,320], index: 2, kind: input, shape index: {}]
  %s3 = inlined_call_operand.vmem [shape: f32[320,64], index: 3, kind: input, shape index: {}]
  %s4 = inlined_call_operand.vmem [shape: f32[1,64], index: 4, kind: input, shape index: {}]
  %s5 = inlined_call_operand.vmem [shape: f32[128,64], index: 5, kind: output, shape index: {}]
  %s6 = sld [smem:[#allocation0]]
  $region53: #{perceptron_forward.1} parent=0
    _
  %s8 = ssub.s32 1, %s6
  %s9 = scalar_select 0, %s8, %s6
  loop: start=0, step=1, limit=10
  $region2: #{perceptron_forward.1} parent=0 // loop_pre_header
    _
  $region3: #{perceptron_forward.1} parent=0 // loop_header
    %s11 = sphi 0, %s15
    %p12 = scmp.ge.s32.totalorder %s11, 10
    %s21 = sphi 0, %s23
    %s24 = sphi 0, %s21
    %s25 = sphi 0, %s24
    %s41 = sphi 0, %s25
    %s45 = sphi 0, %s45
    %s47 = sphi 0, %s45
    %s48 = sphi 0, %s47
    %s62 = sphi 0, %s48
    %s66 = sphi 0, %s66
    %s68 = sphi 0, %s66
    %s69 = sphi 0, %s68
    %s83 = sphi 0, %s69
    %s87 = sphi 0, %s87
    %s89 = sphi 0, %s87
    %s90 = sphi 0, %s89
    %s104 = sphi 0, %s90
    %s108 = sphi 0, %s108
    %s110 = sphi 0, %s108
    %s111 = sphi 0, %s110
    %s125 = sphi 0, %s111
    %s131 = sphi 0, %s133
    %s134 = sphi 0, %s131
    %s135 = sphi 0, %s134
    %s151 = sphi 0, %s135
  $region4: #{perceptron_forward.1} parent=0 // loop_header_branch
    %14 = sbr.rel (%p12) target = $region8
  $region5: #{perceptron_forward.1} parent=0 // loop_body
    %s16 = ssub.s32 %s11, 1
    %s17 = ssub.s32 %s11, 2
    %s18 = sadd.s32 %s11, 1
    %s19 = ssub.s32 %s11, %s18
    %p20 = scmp.eq.s32.totalorder %s19, 0
    %s22 = sadd.s32 %s21, 1
    %s23 = scalar_select %p20, %s21, %s22
    %p26 = pneg %p20
    %p27 = scmp.eq.s32.totalorder %s11, 7
    %p28 = por %p26, %p27
    %p29 = scmp.ne.s32.totalorder %s21, %s24
    %p30 = scmp.eq.s32.totalorder %s11, 0
    %p31 = por %p29, %p30
    %p32 = scmp.ne.s32.totalorder %s21, %s24
    %p33 = scmp.eq.s32.totalorder %s16, 7
    %p34 = por %p32, %p33
    %p35 = scmp.ne.s32.totalorder %s24, %s25
    %p36 = scmp.eq.s32.totalorder %s16, 0
    %p37 = por %p35, %p36
    %p38 = scmp.ne.s32.totalorder %s24, %s25
    %p39 = scmp.eq.s32.totalorder %s17, 7
    %p40 = por %p38, %p39
    %p42 = scmp.ne.s32.totalorder %s25, %s41
    %p43 = scmp.eq.s32.totalorder %s17, 0
    %p44 = por %p42, %p43
    %s46 = sadd.s32 %s45, 1
    %p49 = scmp.eq.s32.totalorder %s11, 7
    %p50 = scmp.ne.s32.totalorder %s45, %s47
    %p51 = scmp.eq.s32.totalorder %s11, 0
    %p52 = por %p50, %p51
    %p53 = scmp.ne.s32.totalorder %s45, %s47
    %p54 = scmp.eq.s32.totalorder %s16, 7
    %p55 = por %p53, %p54
    %p56 = scmp.ne.s32.totalorder %s47, %s48
    %p57 = scmp.eq.s32.totalorder %s16, 0
    %p58 = por %p56, %p57
    %p59 = scmp.ne.s32.totalorder %s47, %s48
    %p60 = scmp.eq.s32.totalorder %s17, 7
    %p61 = por %p59, %p60
    %p63 = scmp.ne.s32.totalorder %s48, %s62
    %p64 = scmp.eq.s32.totalorder %s17, 0
    %p65 = por %p63, %p64
    %s67 = sadd.s32 %s66, 1
    %p70 = scmp.eq.s32.totalorder %s11, 7
    %p71 = scmp.ne.s32.totalorder %s66, %s68
    %p72 = scmp.eq.s32.totalorder %s11, 0
    %p73 = por %p71, %p72
    %p74 = scmp.ne.s32.totalorder %s66, %s68
    %p75 = scmp.eq.s32.totalorder %s16, 7
    %p76 = por %p74, %p75
    %p77 = scmp.ne.s32.totalorder %s68, %s69
    %p78 = scmp.eq.s32.totalorder %s16, 0
    %p79 = por %p77, %p78
    %p80 = scmp.ne.s32.totalorder %s68, %s69
    %p81 = scmp.eq.s32.totalorder %s17, 7
    %p82 = por %p80, %p81
    %p84 = scmp.ne.s32.totalorder %s69, %s83
    %p85 = scmp.eq.s32.totalorder %s17, 0
    %p86 = por %p84, %p85
    %s88 = sadd.s32 %s87, 1
    %p91 = scmp.eq.s32.totalorder %s11, 7
    %p92 = scmp.ne.s32.totalorder %s87, %s89
    %p93 = scmp.eq.s32.totalorder %s11, 0
    %p94 = por %p92, %p93
    %p95 = scmp.ne.s32.totalorder %s87, %s89
    %p96 = scmp.eq.s32.totalorder %s16, 7
    %p97 = por %p95, %p96
    %p98 = scmp.ne.s32.totalorder %s89, %s90
    %p99 = scmp.eq.s32.totalorder %s16, 0
    %p100 = por %p98, %p99
    %p101 = scmp.ne.s32.totalorder %s89, %s90
    %p102 = scmp.eq.s32.totalorder %s17, 7
    %p103 = por %p101, %p102
    %p105 = scmp.ne.s32.totalorder %s90, %s104
    %p106 = scmp.eq.s32.totalorder %s17, 0
    %p107 = por %p105, %p106
    %s109 = sadd.s32 %s108, 1
    %p112 = scmp.eq.s32.totalorder %s11, 7
    %p113 = scmp.ne.s32.totalorder %s108, %s110
    %p114 = scmp.eq.s32.totalorder %s11, 0
    %p115 = por %p113, %p114
    %p116 = scmp.ne.s32.totalorder %s108, %s110
    %p117 = scmp.eq.s32.totalorder %s16, 7
    %p118 = por %p116, %p117
    %p119 = scmp.ne.s32.totalorder %s110, %s111
    %p120 = scmp.eq.s32.totalorder %s16, 0
    %p121 = por %p119, %p120
    %p122 = scmp.ne.s32.totalorder %s110, %s111
    %p123 = scmp.eq.s32.totalorder %s17, 7
    %p124 = por %p122, %p123
    %p126 = scmp.ne.s32.totalorder %s111, %s125
    %p127 = scmp.eq.s32.totalorder %s17, 0
    %p128 = por %p126, %p127
    %s129 = ssub.s32 %s11, %s18
    %p130 = scmp.eq.s32.totalorder %s129, 0
    %s132 = sadd.s32 %s131, 1
    %s133 = scalar_select %p130, %s131, %s132
    %p136 = pneg %p130
    %p137 = scmp.eq.s32.totalorder %s11, 7
    %p138 = por %p136, %p137
    %p139 = scmp.ne.s32.totalorder %s131, %s134
    %p140 = scmp.eq.s32.totalorder %s11, 0
    %p141 = por %p139, %p140
    %p142 = scmp.ne.s32.totalorder %s131, %s134
    %p143 = scmp.eq.s32.totalorder %s16, 7
    %p144 = por %p142, %p143
    %p145 = scmp.ne.s32.totalorder %s134, %s135
    %p146 = scmp.eq.s32.totalorder %s16, 0
    %p147 = por %p145, %p146
    %p148 = scmp.ne.s32.totalorder %s134, %s135
    %p149 = scmp.eq.s32.totalorder %s17, 7
    %p150 = por %p148, %p149
    %p152 = scmp.ne.s32.totalorder %s135, %s151
    %p153 = scmp.eq.s32.totalorder %s17, 0
    %p154 = por %p152, %p153
    %p155 = scmp.le.s32.totalorder 1, %s11
    %p156 = scmp.lt.s32.totalorder %s11, 9
    %p157 = pnand %p155, %p156
    %p158 = pneg %p157
    // Predicated region
    $region9: #{perceptron_forward.1} parent=5 // pred_check
      _
    $region10: #{perceptron_forward.1} parent=5 // pred_check_branch
      %160 = sbr.rel (%p157) target = $region12
    $region11: #{perceptron_forward.1} parent=5 // pred_region
      %s161 = ssub.s32 %s11, 1
      // Predicated region
      $region13: #{perceptron_forward.1} parent=11 // pred_check
        %p162 = pneg %p58
      $region14: #{perceptron_forward.1} parent=11 // pred_check_branch
        %164 = sbr.rel (%p162) target = $region16
      $region15: #{perceptron_forward.1} parent=11 // pred_region
        _
      $region16: #{perceptron_forward.1} parent=11 // pred_fallthru
        _
      // Predicated region
      $region17: #{perceptron_forward.1} parent=11 // pred_check
        %p165 = pneg %p79
      $region18: #{perceptron_forward.1} parent=11 // pred_check_branch
        %167 = sbr.rel (%p165) target = $region20
      $region19: #{perceptron_forward.1} parent=11 // pred_region
        _
      $region20: #{perceptron_forward.1} parent=11 // pred_fallthru
        _
      // Predicated region
      $region21: #{perceptron_forward.1} parent=11 // pred_check
        %p168 = pneg %p100
      $region22: #{perceptron_forward.1} parent=11 // pred_check_branch
        %170 = sbr.rel (%p168) target = $region24
      $region23: #{perceptron_forward.1} parent=11 // pred_region
        _
      $region24: #{perceptron_forward.1} parent=11 // pred_fallthru
        _
      // Predicated region
      $region25: #{perceptron_forward.1} parent=11 // pred_check
        %p171 = pneg %p121
      $region26: #{perceptron_forward.1} parent=11 // pred_check_branch
        %173 = sbr.rel (%p171) target = $region28
      $region27: #{perceptron_forward.1} parent=11 // pred_region
        _
      $region28: #{perceptron_forward.1} parent=11 // pred_fallthru
        _
    $region12: #{perceptron_forward.1} parent=5 // pred_fallthru
      _
    %p174 = scmp.lt.s32.totalorder %s11, 8
    // Predicated region
    $region29: #{perceptron_forward.1} parent=5 // pred_check
      %p175 = pneg %p174
    $region30: #{perceptron_forward.1} parent=5 // pred_check_branch
      %177 = sbr.rel (%p175) target = $region32
    $region31: #{perceptron_forward.1} parent=5 // pred_region
      // Predicated region
      $region33: #{perceptron_forward.1} parent=31 // pred_check
        %p178 = pneg %p31
      $region34: #{perceptron_forward.1} parent=31 // pred_check_branch
        %180 = sbr.rel (%p178) target = $region36
      $region35: #{perceptron_forward.1} parent=31 // pred_region
        %s181 = smul.u32 2, %s11
        %p182 = scmp.lt.s32.totalorder %s181, 15
        %s183 = scalar_select %p182, %s181, 15
        %s184 = smul.addr %s183, 8
        %s185 = scalar_lea.vmem %s0, %s184
        %s186 = smul.u32 2, %s11
      $region36: #{perceptron_forward.1} parent=31 // pred_fallthru
        _
    $region32: #{perceptron_forward.1} parent=5 // pred_fallthru
      _
    %p187 = scmp.le.s32.totalorder 1, %s11
    %p188 = scmp.lt.s32.totalorder %s11, 9
    %p189 = pnand %p187, %p188
    %p190 = pneg %p189
    // Predicated region
    $region37: #{perceptron_forward.1} parent=5 // pred_check
      _
    $region38: #{perceptron_forward.1} parent=5 // pred_check_branch
      %192 = sbr.rel (%p189) target = $region40
    $region39: #{perceptron_forward.1} parent=5 // pred_region
      %s193 = ssub.s32 %s11, 1
      %s194 = smul.u32 2, %s16
      %p195 = scmp.lt.s32.totalorder %s194, 15
      %s196 = scalar_select %p195, %s194, 15
      %s197 = smul.addr %s196, 8
      %s198 = scalar_lea.vmem %s0, %s197
      %p199 = pneg %p37
      %p200 = pneg %p34
      %p201 = pneg %p58
      %p202 = pneg %p55
      %p203 = pneg %p79
      %p204 = pneg %p76
      %p205 = pneg %p100
      %p206 = pneg %p97
      %p207 = pneg %p121
      %p208 = pneg %p118
      %p209 = pneg %p147
      %p210 = pneg %p144
      %s211 = smul.u32 2, %s16
      %p212 = scmp.lt.s32.totalorder %s211, 15
      %s213 = scalar_select %p212, %s211, 15
      %s214 = smul.addr %s213, 8
      %s215 = scalar_lea.vmem %s5, %s214
      %s216 = smul.u32 2, %s16
      %p217 = scmp.lt.s32.totalorder %s216, 15
      %s218 = scalar_select %p217, %s216, 15
      %s219 = smul.addr %s218, 8
      %s220 = scalar_lea.vmem %s0, %s219
      %s221 = smul.u32 2, %s16
      %s222 = smul.u32 2, %s16
      %p223 = scmp.lt.s32.totalorder %s222, 15
      %s224 = scalar_select %p223, %s222, 15
      %s225 = smul.addr %s224, 8
      %s226 = scalar_lea.vmem %s5, %s225
      %s227 = smul.u32 2, %s16
      %v228 = vld [vmem:[%s220] sm:$0xff]
      %v229 = vld [vmem:[%s220 + $0x8] sm:$0xff]
      %v230 = vld [vmem:[%s1] sm:$0xff]
      %v231 = vld [vmem:[%s1 + $0x8] sm:$0xff]
      %v232 = vld [vmem:[%s1 + $0x10] sm:$0xff]
      %v233 = vld [vmem:[%s1 + $0x18] sm:$0xff]
      %v234 = vld [vmem:[%s1 + $0x20] sm:$0xff]
      %v235 = vld [vmem:[%s1 + $0x28] sm:$0xff]
      %v236 = vld [vmem:[%s1 + $0x30] sm:$0xff]
      %v237 = vld [vmem:[%s1 + $0x38] sm:$0xff]
      %v238 = vld [vmem:[%s1 + $0x40] sm:$0xff]
      %v239 = vld [vmem:[%s1 + $0x48] sm:$0xff]
      %v240 = vld [vmem:[%s1 + $0x50] sm:$0xff]
      %v241 = vld [vmem:[%s1 + $0x58] sm:$0xff]
      %v242 = vld [vmem:[%s1 + $0x60] sm:$0xff]
      %v243 = vld [vmem:[%s1 + $0x68] sm:$0xff]
      %v244 = vld [vmem:[%s1 + $0x70] sm:$0xff]
      %v245 = vld [vmem:[%s1 + $0x78] sm:$0xff]
      %v246 = vld [vmem:[%s1 + $0x80] sm:$0xff]
      %v247 = vld [vmem:[%s1 + $0x88] sm:$0xff]
      %v248 = vld [vmem:[%s1 + $0x90] sm:$0xff]
      %v249 = vld [vmem:[%s1 + $0x98] sm:$0xff]
      %v250 = vld [vmem:[%s1 + $0xa0] sm:$0xff]
      %v251 = vld [vmem:[%s1 + $0xa8] sm:$0xff]
      %v252 = vld [vmem:[%s1 + $0xb0] sm:$0xff]
      %v253 = vld [vmem:[%s1 + $0xb8] sm:$0xff]
      %v254 = vld [vmem:[%s1 + $0xc0] sm:$0xff]
      %v255 = vld [vmem:[%s1 + $0xc8] sm:$0xff]
      %v256 = vld [vmem:[%s1 + $0xd0] sm:$0xff]
      %v257 = vld [vmem:[%s1 + $0xd8] sm:$0xff]
      %v258 = vld [vmem:[%s1 + $0xe0] sm:$0xff]
      %v259 = vld [vmem:[%s1 + $0xe8] sm:$0xff]
      %v260 = vld [vmem:[%s1 + $0xf0] sm:$0xff]
      %v261 = vld [vmem:[%s1 + $0xf8] sm:$0xff]
      %v262 = vld [vmem:[%s1 + $0x100] sm:$0xff]
      %v263 = vld [vmem:[%s1 + $0x108] sm:$0xff]
      %v264 = vld [vmem:[%s1 + $0x110] sm:$0xff]
      %v265 = vld [vmem:[%s1 + $0x118] sm:$0xff]
      %v266 = vld [vmem:[%s1 + $0x120] sm:$0xff]
      %v267 = vld [vmem:[%s1 + $0x128] sm:$0xff]
      %v268 = vld [vmem:[%s1 + $0x130] sm:$0xff]
      %v269 = vld [vmem:[%s1 + $0x138] sm:$0xff]
      %v270 = vld [vmem:[%s1 + $0x140] sm:$0xff]
      %v271 = vld [vmem:[%s1 + $0x148] sm:$0xff]
      %v272 = vld [vmem:[%s1 + $0x150] sm:$0xff]
      %v273 = vld [vmem:[%s1 + $0x158] sm:$0xff]
      %v274 = vld [vmem:[%s1 + $0x160] sm:$0xff]
      %v275 = vld [vmem:[%s1 + $0x168] sm:$0xff]
      %v276 = vld [vmem:[%s1 + $0x170] sm:$0xff]
      %v277 = vld [vmem:[%s1 + $0x178] sm:$0xff]
      %v278 = vld [vmem:[%s2] sm:$0x7]
      %v280 = vlaneseq
      %v281 = vshrl.u32 %v280, 7
      %v282 = vsub.s32 0, %v281
      %v283 = vrot.slane %v278, %v282
      %v284 = vlaneseq
      %v285 = vshrl.u32 %v284, 7
      %v286 = vsub.s32 1, %v285
      %v287 = vrot.slane %v278, %v286
      %v288 = vlaneseq
      %v289 = vshrl.u32 %v288, 7
      %v290 = vsub.s32 2, %v289
      %v291 = vrot.slane %v278, %v290
      %295 = vmatprep.subr.mxu0 %v231
      %296 = vmatpush1.msra.mxu0 %v230
      %297 = vmatprep.subr.mxu0 %v234
      %298 = vmatpush1.msra.mxu0 %v233
      %299 = vmatprep.subr.mxu0 %v237
      %300 = vmatpush1.msra.mxu0 %v236
      %301 = vmatprep.subr.mxu0 %v240
      %302 = vmatpush1.msra.mxu0 %v239
      %303 = vmatprep.subr.mxu0 %v243
      %304 = vmatpush1.msra.mxu0 %v242
      %305 = vmatprep.subr.mxu0 %v246
      %306 = vmatpush1.msra.mxu0 %v245
      %307 = vmatprep.subr.mxu0 %v249
      %308 = vmatpush1.msra.mxu0 %v248
      %309 = vmatprep.subr.mxu0 %v252
      %310 = vmatpush1.msra.mxu0 %v251
      %311 = vmatprep.subr.mxu0 %v255
      %312 = vmatpush1.msra.mxu0 %v254
      %313 = vmatprep.subr.mxu0 %v258
      %314 = vmatpush1.msra.mxu0 %v257
      %315 = vmatprep.subr.mxu0 %v261
      %316 = vmatpush1.msra.mxu0 %v260
      %317 = vmatprep.subr.mxu0 %v264
      %318 = vmatpush1.msra.mxu0 %v263
      %319 = vmatprep.subr.mxu0 %v267
      %320 = vmatpush1.msra.mxu0 %v266
      %321 = vmatprep.subr.mxu0 %v270
      %322 = vmatpush1.msra.mxu0 %v269
      %323 = vmatprep.subr.mxu0 %v273
      %324 = vmatpush1.msra.mxu0 %v272
      %325 = vmatprep.subr.mxu0 %v276
      %326 = vmatpush1.msra.mxu0 %v275
      %327 = vmatprep.subr.mxu0 0.0
      %328 = vmatpush1.msra.mxu0 0.0
      %329 = vmatprep.subr.mxu0 0.0
      %330 = vmatpush1.msra.mxu0 0.0
      %331 = vmatprep.subr.mxu0 0.0
      %332 = vmatpush1.msra.mxu0 0.0
      %333 = vmatprep.subr.mxu0 0.0
      %334 = vmatpush1.msra.mxu0 0.0
      %335 = vmatprep.subr.mxu0 0.0
      %336 = vmatpush1.msra.mxu0 0.0
      %337 = vmatprep.subr.mxu0 0.0
      %338 = vmatpush1.msra.mxu0 0.0
      %339 = vmatprep.subr.mxu0 0.0
      %340 = vmatpush1.msra.mxu0 0.0
      %341 = vmatprep.subr.mxu0 0.0
      %342 = vmatpush1.msra.mxu0 0.0
      %343 = vmatprep.subr.mxu0 0.0
      %344 = vmatpush1.msra.mxu0 0.0
      %345 = vmatprep.subr.mxu0 0.0
      %346 = vmatpush1.msra.mxu0 0.0
      %347 = vmatprep.subr.mxu0 0.0
      %348 = vmatpush1.msra.mxu0 0.0
      %349 = vmatprep.subr.mxu0 0.0
      %350 = vmatpush1.msra.mxu0 0.0
      %351 = vmatprep.subr.mxu0 0.0
      %352 = vmatpush1.msra.mxu0 0.0
      %353 = vmatprep.subr.mxu0 0.0
      %354 = vmatpush1.msra.mxu0 0.0
      %355 = vmatprep.subr.mxu0 0.0
      %356 = vmatpush1.msra.mxu0 0.0
      %357 = vmatprep.subr.mxu0 0.0
      %358 = vmatpush1.msra.mxu0 0.0
      %359 = vmatprep.mubr.f32.mxu0 0.0
      %360 = vmatmul.mubr.f32.gmra.mrb[0].mxu0 %v228
      %v361 = vpop.f32.mrb[0].mxu0
      %v362 = vadd.f32 %v283, %v361
      %v363 = vpop.f32.mrb[0].mxu0
      %v364 = vadd.f32 %v287, %v363
      %365 = vmatprep.mubr.f32.mxu0 0.0
      %366 = vmatmul.mubr.f32.gmra.mrb[0].mxu0 %v229
      %v367 = vpop.f32.mrb[0].mxu0
      %v368 = vadd.f32 %v283, %v367
      %v369 = vpop.f32.mrb[0].mxu0
      %v370 = vadd.f32 %v287, %v369
      %371 = vdwg.mxu0
      %372 = vmatprep.subr.mxu0 0.0
      %373 = vmatpush1.msra.mxu0 %v232
      %374 = vmatprep.subr.mxu0 0.0
      %375 = vmatpush1.msra.mxu0 %v235
      %376 = vmatprep.subr.mxu0 0.0
      %377 = vmatpush1.msra.mxu0 %v238
      %378 = vmatprep.subr.mxu0 0.0
      %379 = vmatpush1.msra.mxu0 %v241
      %380 = vmatprep.subr.mxu0 0.0
      %381 = vmatpush1.msra.mxu0 %v244
      %382 = vmatprep.subr.mxu0 0.0
      %383 = vmatpush1.msra.mxu0 %v247
      %384 = vmatprep.subr.mxu0 0.0
      %385 = vmatpush1.msra.mxu0 %v250
      %386 = vmatprep.subr.mxu0 0.0
      %387 = vmatpush1.msra.mxu0 %v253
      %388 = vmatprep.subr.mxu0 0.0
      %389 = vmatpush1.msra.mxu0 %v256
      %390 = vmatprep.subr.mxu0 0.0
      %391 = vmatpush1.msra.mxu0 %v259
      %392 = vmatprep.subr.mxu0 0.0
      %393 = vmatpush1.msra.mxu0 %v262
      %394 = vmatprep.subr.mxu0 0.0
      %395 = vmatpush1.msra.mxu0 %v265
      %396 = vmatprep.subr.mxu0 0.0
      %397 = vmatpush1.msra.mxu0 %v268
      %398 = vmatprep.subr.mxu0 0.0
      %399 = vmatpush1.msra.mxu0 %v271
      %400 = vmatprep.subr.mxu0 0.0
      %401 = vmatpush1.msra.mxu0 %v274
      %402 = vmatprep.subr.mxu0 0.0
      %403 = vmatpush1.msra.mxu0 %v277
      %404 = vmatprep.subr.mxu0 0.0
      %405 = vmatpush1.msra.mxu0 0.0
      %406 = vmatprep.subr.mxu0 0.0
      %407 = vmatpush1.msra.mxu0 0.0
      %408 = vmatprep.subr.mxu0 0.0
      %409 = vmatpush1.msra.mxu0 0.0
      %410 = vmatprep.subr.mxu0 0.0
      %411 = vmatpush1.msra.mxu0 0.0
      %412 = vmatprep.subr.mxu0 0.0
      %413 = vmatpush1.msra.mxu0 0.0
      %414 = vmatprep.subr.mxu0 0.0
      %415 = vmatpush1.msra.mxu0 0.0
      %416 = vmatprep.subr.mxu0 0.0
      %417 = vmatpush1.msra.mxu0 0.0
      %418 = vmatprep.subr.mxu0 0.0
      %419 = vmatpush1.msra.mxu0 0.0
      %420 = vmatprep.subr.mxu0 0.0
      %421 = vmatpush1.msra.mxu0 0.0
      %422 = vmatprep.subr.mxu0 0.0
      %423 = vmatpush1.msra.mxu0 0.0
      %424 = vmatprep.subr.mxu0 0.0
      %425 = vmatpush1.msra.mxu0 0.0
      %426 = vmatprep.subr.mxu0 0.0
      %427 = vmatpush1.msra.mxu0 0.0
      %428 = vmatprep.subr.mxu0 0.0
      %429 = vmatpush1.msra.mxu0 0.0
      %430 = vmatprep.subr.mxu0 0.0
      %431 = vmatpush1.msra.mxu0 0.0
      %432 = vmatprep.subr.mxu0 0.0
      %433 = vmatpush1.msra.mxu0 0.0
      %434 = vmatprep.subr.mxu0 0.0
      %435 = vmatpush1.msra.mxu0 0.0
      %436 = vmatprep.mubr.f32.mxu0 0.0
      %437 = vmatmul.mubr.f32.gmra.mrb[0].mxu0 %v228
      %v438 = vpop.f32.mrb[0].mxu0
      %v439 = vadd.f32 %v291, %v438
      %v440 = vpop.f32.mrb[0].mxu0
      %441 = vmatprep.mubr.f32.mxu0 0.0
      %442 = vmatmul.mubr.f32.gmra.mrb[0].mxu0 %v229
      %v443 = vpop.f32.mrb[0].mxu0
      %v444 = vadd.f32 %v291, %v443
      %v445 = vpop.f32.mrb[0].mxu0
      %446 = vdwg.mxu0
      %v447 = vmax.f32 %v362, 0.0
      %v448 = vmax.f32 %v364, 0.0
      %v449 = vmax.f32 %v439, 0.0
      %v450 = vmax.f32 %v368, 0.0
      %v451 = vmax.f32 %v370, 0.0
      %v452 = vmax.f32 %v444, 0.0
      %v453 = vld [vmem:[%s3] sm:$0xff]
      %v454 = vld [vmem:[%s3 + $0x8] sm:$0xff]
      %v455 = vld [vmem:[%s3 + $0x10] sm:$0xff]
      %v456 = vld [vmem:[%s3 + $0x18] sm:$0xff]
      %v457 = vld [vmem:[%s3 + $0x20] sm:$0xff]
      %v458 = vld [vmem:[%s3 + $0x28] sm:$0xff]
      %v459 = vld [vmem:[%s3 + $0x30] sm:$0xff]
      %v460 = vld [vmem:[%s3 + $0x38] sm:$0xff]
      %v461 = vld [vmem:[%s3 + $0x40] sm:$0xff]
      %v462 = vld [vmem:[%s3 + $0x48] sm:$0xff]
      %v463 = vld [vmem:[%s3 + $0x50] sm:$0xff]
      %v464 = vld [vmem:[%s3 + $0x58] sm:$0xff]
      %v465 = vld [vmem:[%s3 + $0x60] sm:$0xff]
      %v466 = vld [vmem:[%s3 + $0x68] sm:$0xff]
      %v467 = vld [vmem:[%s3 + $0x70] sm:$0xff]
      %v468 = vld [vmem:[%s3 + $0x78] sm:$0xff]
      %v469 = vld [vmem:[%s3 + $0x80] sm:$0xff]
      %v470 = vld [vmem:[%s3 + $0x88] sm:$0xff]
      %v471 = vld [vmem:[%s3 + $0x90] sm:$0xff]
      %v472 = vld [vmem:[%s3 + $0x98] sm:$0xff]
      %v473 = vld [vmem:[%s3 + $0xa0] sm:$0xff]
      %v474 = vld [vmem:[%s3 + $0xa8] sm:$0xff]
      %v475 = vld [vmem:[%s3 + $0xb0] sm:$0xff]
      %v476 = vld [vmem:[%s3 + $0xb8] sm:$0xff]
      %v477 = vld [vmem:[%s3 + $0xc0] sm:$0xff]
      %v478 = vld [vmem:[%s3 + $0xc8] sm:$0xff]
      %v479 = vld [vmem:[%s3 + $0xd0] sm:$0xff]
      %v480 = vld [vmem:[%s3 + $0xd8] sm:$0xff]
      %v481 = vld [vmem:[%s3 + $0xe0] sm:$0xff]
      %v482 = vld [vmem:[%s3 + $0xe8] sm:$0xff]
      %v483 = vld [vmem:[%s3 + $0xf0] sm:$0xff]
      %v484 = vld [vmem:[%s3 + $0xf8] sm:$0xff]
      %v485 = vld [vmem:[%s3 + $0x100] sm:$0xff]
      %v486 = vld [vmem:[%s3 + $0x108] sm:$0xff]
      %v487 = vld [vmem:[%s3 + $0x110] sm:$0xff]
      %v488 = vld [vmem:[%s3 + $0x118] sm:$0xff]
      %v489 = vld [vmem:[%s3 + $0x120] sm:$0xff]
      %v490 = vld [vmem:[%s3 + $0x128] sm:$0xff]
      %v491 = vld [vmem:[%s3 + $0x130] sm:$0xff]
      %v492 = vld [vmem:[%s3 + $0x138] sm:$0xff]
      %v493 = vld [vmem:[%s4] sm:$0x1]
      %v495 = vlaneseq
      %v496 = vshrl.u32 %v495, 7
      %v497 = vsub.s32 0, %v496
      %v498 = vrot.slane %v493, %v497
      %vm500 = vcmask 523264
      %v502 = vsel %vm500, %v449, 0
      %v505 = vsel %vm500, %v452, 0
      %507 = vmatprep.subr.mxu0 0.0
      %508 = vmatpush1.msra.mxu0 %v453
      %509 = vmatprep.subr.mxu0 0.0
      %510 = vmatpush1.msra.mxu0 %v454
      %511 = vmatprep.subr.mxu0 0.0
      %512 = vmatpush1.msra.mxu0 %v455
      %513 = vmatprep.subr.mxu0 0.0
      %514 = vmatpush1.msra.mxu0 %v456
      %515 = vmatprep.subr.mxu0 0.0
      %516 = vmatpush1.msra.mxu0 %v457
      %517 = vmatprep.subr.mxu0 0.0
      %518 = vmatpush1.msra.mxu0 %v458
      %519 = vmatprep.subr.mxu0 0.0
      %520 = vmatpush1.msra.mxu0 %v459
      %521 = vmatprep.subr.mxu0 0.0
      %522 = vmatpush1.msra.mxu0 %v460
      %523 = vmatprep.subr.mxu0 0.0
      %524 = vmatpush1.msra.mxu0 %v461
      %525 = vmatprep.subr.mxu0 0.0
      %526 = vmatpush1.msra.mxu0 %v462
      %527 = vmatprep.subr.mxu0 0.0
      %528 = vmatpush1.msra.mxu0 %v463
      %529 = vmatprep.subr.mxu0 0.0
      %530 = vmatpush1.msra.mxu0 %v464
      %531 = vmatprep.subr.mxu0 0.0
      %532 = vmatpush1.msra.mxu0 %v465
      %533 = vmatprep.subr.mxu0 0.0
      %534 = vmatpush1.msra.mxu0 %v466
      %535 = vmatprep.subr.mxu0 0.0
      %536 = vmatpush1.msra.mxu0 %v467
      %537 = vmatprep.subr.mxu0 0.0
      %538 = vmatpush1.msra.mxu0 %v468
      %539 = vmatprep.subr.mxu0 0.0
      %540 = vmatpush1.msra.mxu0 %v469
      %541 = vmatprep.subr.mxu0 0.0
      %542 = vmatpush1.msra.mxu0 %v470
      %543 = vmatprep.subr.mxu0 0.0
      %544 = vmatpush1.msra.mxu0 %v471
      %545 = vmatprep.subr.mxu0 0.0
      %546 = vmatpush1.msra.mxu0 %v472
      %547 = vmatprep.subr.mxu0 0.0
      %548 = vmatpush1.msra.mxu0 %v473
      %549 = vmatprep.subr.mxu0 0.0
      %550 = vmatpush1.msra.mxu0 %v474
      %551 = vmatprep.subr.mxu0 0.0
      %552 = vmatpush1.msra.mxu0 %v475
      %553 = vmatprep.subr.mxu0 0.0
      %554 = vmatpush1.msra.mxu0 %v476
      %555 = vmatprep.subr.mxu0 0.0
      %556 = vmatpush1.msra.mxu0 %v477
      %557 = vmatprep.subr.mxu0 0.0
      %558 = vmatpush1.msra.mxu0 %v478
      %559 = vmatprep.subr.mxu0 0.0
      %560 = vmatpush1.msra.mxu0 %v479
      %561 = vmatprep.subr.mxu0 0.0
      %562 = vmatpush1.msra.mxu0 %v480
      %563 = vmatprep.subr.mxu0 0.0
      %564 = vmatpush1.msra.mxu0 %v481
      %565 = vmatprep.subr.mxu0 0.0
      %566 = vmatpush1.msra.mxu0 %v482
      %567 = vmatprep.subr.mxu0 0.0
      %568 = vmatpush1.msra.mxu0 %v483
      %569 = vmatprep.subr.mxu0 0.0
      %570 = vmatpush1.msra.mxu0 %v484
      %571 = vmatprep.mubr.f32.mxu0 %v448
      %572 = vmatmul.mubr.f32.gmra.mrb[0].mxu0 %v447
      %v573 = vpop.f32.mrb[0].mxu0
      %v574 = vadd.f32 %v498, %v573
      %v575 = vpop.f32.mrb[0].mxu0
      %576 = vmatprep.mubr.f32.mxu0 %v451
      %577 = vmatmul.mubr.f32.gmra.mrb[0].mxu0 %v450
      %v578 = vpop.f32.mrb[0].mxu0
      %v579 = vadd.f32 %v498, %v578
      %v580 = vpop.f32.mrb[0].mxu0
      %581 = vdwg.mxu0
      %582 = vmatprep.subr.mxu0 0.0
      %583 = vmatpush1.msra.mxu0 %v485
      %584 = vmatprep.subr.mxu0 0.0
      %585 = vmatpush1.msra.mxu0 %v486
      %586 = vmatprep.subr.mxu0 0.0
      %587 = vmatpush1.msra.mxu0 %v487
      %588 = vmatprep.subr.mxu0 0.0
      %589 = vmatpush1.msra.mxu0 %v488
      %590 = vmatprep.subr.mxu0 0.0
      %591 = vmatpush1.msra.mxu0 %v489
      %592 = vmatprep.subr.mxu0 0.0
      %593 = vmatpush1.msra.mxu0 %v490
      %594 = vmatprep.subr.mxu0 0.0
      %595 = vmatpush1.msra.mxu0 %v491
      %596 = vmatprep.subr.mxu0 0.0
      %597 = vmatpush1.msra.mxu0 %v492
      %598 = vmatprep.subr.mxu0 0.0
      %599 = vmatpush1.msra.mxu0 0.0
      %600 = vmatprep.subr.mxu0 0.0
      %601 = vmatpush1.msra.mxu0 0.0
      %602 = vmatprep.subr.mxu0 0.0
      %603 = vmatpush1.msra.mxu0 0.0
      %604 = vmatprep.subr.mxu0 0.0
      %605 = vmatpush1.msra.mxu0 0.0
      %606 = vmatprep.subr.mxu0 0.0
      %607 = vmatpush1.msra.mxu0 0.0
      %608 = vmatprep.subr.mxu0 0.0
      %609 = vmatpush1.msra.mxu0 0.0
      %610 = vmatprep.subr.mxu0 0.0
      %611 = vmatpush1.msra.mxu0 0.0
      %612 = vmatprep.subr.mxu0 0.0
      %613 = vmatpush1.msra.mxu0 0.0
      %614 = vmatprep.subr.mxu0 0.0
      %615 = vmatpush1.msra.mxu0 0.0
      %616 = vmatprep.subr.mxu0 0.0
      %617 = vmatpush1.msra.mxu0 0.0
      %618 = vmatprep.subr.mxu0 0.0
      %619 = vmatpush1.msra.mxu0 0.0
      %620 = vmatprep.subr.mxu0 0.0
      %621 = vmatpush1.msra.mxu0 0.0
      %622 = vmatprep.subr.mxu0 0.0
      %623 = vmatpush1.msra.mxu0 0.0
      %624 = vmatprep.subr.mxu0 0.0
      %625 = vmatpush1.msra.mxu0 0.0
      %626 = vmatprep.subr.mxu0 0.0
      %627 = vmatpush1.msra.mxu0 0.0
      %628 = vmatprep.subr.mxu0 0.0
      %629 = vmatpush1.msra.mxu0 0.0
      %630 = vmatprep.subr.mxu0 0.0
      %631 = vmatpush1.msra.mxu0 0.0
      %632 = vmatprep.subr.mxu0 0.0
      %633 = vmatpush1.msra.mxu0 0.0
      %634 = vmatprep.subr.mxu0 0.0
      %635 = vmatpush1.msra.mxu0 0.0
      %636 = vmatprep.subr.mxu0 0.0
      %637 = vmatpush1.msra.mxu0 0.0
      %638 = vmatprep.subr.mxu0 0.0
      %639 = vmatpush1.msra.mxu0 0.0
      %640 = vmatprep.subr.mxu0 0.0
      %641 = vmatpush1.msra.mxu0 0.0
      %642 = vmatprep.subr.mxu0 0.0
      %643 = vmatpush1.msra.mxu0 0.0
      %644 = vmatprep.subr.mxu0 0.0
      %645 = vmatpush1.msra.mxu0 0.0
      %646 = vmatprep.mubr.f32.mxu0 0.0
      %647 = vmatmul.mubr.f32.gmra.mrb[0].mxu0 %v502
      %v648 = vpop.f32.mrb[0].mxu0
      %v649 = vadd.f32 %v574, %v648
      %v650 = vpop.f32.mrb[0].mxu0
      %651 = vmatprep.mubr.f32.mxu0 0.0
      %652 = vmatmul.mubr.f32.gmra.mrb[0].mxu0 %v505
      %v653 = vpop.f32.mrb[0].mxu0
      %v654 = vadd.f32 %v579, %v653
      %v655 = vpop.f32.mrb[0].mxu0
      %656 = vdwg.mxu0
      %657 = vst.msk [vmem:[%s226] sm:$0xff] %vm500, %v649
      %658 = vst.msk [vmem:[%s226 + $0x8] sm:$0xff] %vm500, %v654
      %s659 = smul.u32 2, %s16
      %p660 = scmp.lt.s32.totalorder %s659, 15
      %s661 = scalar_select %p660, %s659, 15
      %s662 = smul.addr %s661, 8
      %s663 = scalar_lea.vmem %s5, %s662
      // Predicated region
      $region41: #{perceptron_forward.1} parent=39 // pred_check
        %p664 = pneg %p144
      $region42: #{perceptron_forward.1} parent=39 // pred_check_branch
        %666 = sbr.rel (%p664) target = $region44
      $region43: #{perceptron_forward.1} parent=39 // pred_region
        %s667 = smul.u32 2, %s16
      $region44: #{perceptron_forward.1} parent=39 // pred_fallthru
        _
    $region40: #{perceptron_forward.1} parent=5 // pred_fallthru
      _
    %p668 = scmp.le.s32.totalorder 2, %s11
    // Predicated region
    $region45: #{perceptron_forward.1} parent=5 // pred_check
      %p669 = pneg %p668
    $region46: #{perceptron_forward.1} parent=5 // pred_check_branch
      %671 = sbr.rel (%p669) target = $region48
    $region47: #{perceptron_forward.1} parent=5 // pred_region
      %s672 = ssub.s32 %s11, 2
      // Predicated region
      $region49: #{perceptron_forward.1} parent=47 // pred_check
        %p673 = pneg %p150
      $region50: #{perceptron_forward.1} parent=47 // pred_check_branch
        %675 = sbr.rel (%p673) target = $region52
      $region51: #{perceptron_forward.1} parent=47 // pred_region
        %s676 = smul.u32 2, %s17
        %p677 = scmp.lt.s32.totalorder %s676, 15
        %s678 = scalar_select %p677, %s676, 15
        %s679 = smul.addr %s678, 8
        %s680 = scalar_lea.vmem %s5, %s679
      $region52: #{perceptron_forward.1} parent=47 // pred_fallthru
        _
    $region48: #{perceptron_forward.1} parent=5 // pred_fallthru
      _
  $region6: #{perceptron_forward.1} parent=0 // loop_footer
    %s15 = sadd.s32 1, %s11
  $region7: #{perceptron_forward.1} parent=0 // loop_footer_branch
    %10 = sbr.rel target = $region3
  $region8: #{perceptron_forward.1} parent=0 // loop_exit
    _

</llo_original>
